<compile_context>
chip_gen: v5e
topology: v5e:2x2
jax: 0.10.0
libtpu: 0.0.40
codegen_flags: <defaults>
</compile_context>

<pallas_src>
import functools

import jax
import jax.numpy as jnp
from jax.experimental import pallas as pl
from jax.experimental.pallas import tpu as pltpu


_VMEM_LIMIT_BYTES = 32 << 20  # explicit scoped-VMEM limit; <= physical on v5e/v6e/v7x


# ---------------------------------------------------------------------------
# Hardware / sizing helpers
# ---------------------------------------------------------------------------
@functools.lru_cache(maxsize=1)
def _device_kind():
    try:
        return jax.devices()[0].device_kind.lower()
    except Exception:
        return ""


def _tensorcores_per_chip():
    k = _device_kind()
    return 2 if ("v7" in k or "7x" in k) else 1


def _block_budget_bytes():
    # Per-block (single-buffer-equivalent) VMEM budget; doubled buffers + f32
    # intermediates are accounted for by the callers' per_batch estimates.
    return (4 << 20) if "v5" in _device_kind() else (8 << 20)


def _padded_block_bytes(rows, cols, itemsize):
    """Real VMEM bytes of a (rows, cols) tile: cols padded to 128 lanes, rows to the
    dtype sublane multiple (8 for 4-byte, 16 for 2-byte, 32 for 1-byte)."""
    sub = {4: 8, 2: 16, 1: 32}.get(int(itemsize), 8)
    r = -(-rows // sub) * sub
    c = -(-cols // 128) * 128
    return r * c * int(itemsize)


def _pick_block_batches(B, per_batch_bytes, budget_bytes):
    """Batches per grid step, padding-aware and generation-aware."""
    bt = max(1, min(B, budget_bytes // max(1, per_batch_bytes)))
    cores = _tensorcores_per_chip()
    if cores > 1:
        # Megacore: keep several grid steps per TensorCore so the BlockSpec
        # double-buffer has something to overlap (>= 4 steps per core).
        min_steps = 4 * cores
        if B >= min_steps:
            bt = min(bt, -(-B // min_steps))
    if bt >= 8:
        bt -= bt % 8  # sublane-aligned batch axis -> unmasked output stores
    return int(max(1, min(bt, B)))


# ---------------------------------------------------------------------------
# Kernels
# ---------------------------------------------------------------------------
def _reduce_kernel(x_ref, o_ref, *, op, inv_n):
    # Unpacked fallback. x_ref: (Bt, N, E), o_ref: (Bt, E).
    x = x_ref[...].astype(jnp.float32)
    if op == "mean":
        r = jnp.sum(x, axis=1) * inv_n
    else:
        r = jnp.max(x, axis=1)
    o_ref[...] = r.astype(o_ref.dtype)


def _reduce_packed_kernel(x_ref, o_ref, *, op, E, inv_n):
    # Lane-packed path. x_ref: (Bt, N/g, g*E) with g*E == 128, o_ref: (Bt, E).
    x = x_ref[...].astype(jnp.float32)
    if op == "mean":
        red = jnp.sum(x, axis=1)            # (Bt, g*E)  sublane reduce
        combine = lambda a, b: a + b
    else:
        red = jnp.max(x, axis=1)
        combine = jnp.maximum
    # Finish the within-group reduction across lanes with a log2(g)-step tree.
    # Pure lane work in a slot this HBM-bound kernel isn't using.
    span = red.shape[-1]
    while span > E:
        half = span // 2
        red = combine(red[:, :half], red[:, half:span])
        span = half
    if op == "mean":
        red = red * inv_n
    o_ref[...] = red.astype(o_ref.dtype)


def _expert_kernel(x_ref, w1_ref, b1_ref, w2_ref, b2_ref, o_ref, s_ref):
    # x_ref: (Bt, N, E)   w1_ref: (E, E) (in,out layout, cast to X dtype)
    # b1_ref: (1, E) f32  w2_ref: (1, E) f32 (PyTorch W2 row)   b2_ref: (1,) f32 SMEM
    # o_ref: (Bt, E)      s_ref: (Bt, N) f32 (lane-dense)
    x = x_ref[...]                                   # native dtype for the MXU
    Bt, N, E = x.shape
    # Flatten the batch for one big MXU pass. With N a multiple of the sublane
    # tile (8 f32 / 16 bf16) this reshape is a layout no-op.
    x2 = x.reshape(Bt * N, E)

    # h = tanh(X @ W1^T + b1): single MXU matmul over the flattened batch, f32 accum.
    h = jnp.tanh(
        jnp.dot(x2, w1_ref[...], preferred_element_type=jnp.float32)
        + b1_ref[...].astype(jnp.float32)
    ).reshape(Bt, N, E)                              # (Bt, N, E) f32

    # logits = h @ W2^T + b2 as a VPU multiply + lane reduce (a width-1 MXU matmul
    # would waste a full systolic pass and produce a lane-sparse result).
    logits = jnp.sum(h * w2_ref[...].astype(jnp.float32), axis=-1) + b2_ref[0]

    # Softmax over the node axis (PyTorch dim=1), the dense lane axis here.
    m = jnp.max(logits, axis=-1, keepdims=True)
    e = jnp.exp(logits - m)
    denom = jnp.sum(e, axis=-1, keepdims=True)       # (Bt, 1)
    s = e * pl.reciprocal(denom, approx=False)       # exact divide keeps 1e-5 tol

    s_ref[...] = s                                   # f32, lane-dense store

    # pooled[b, :] = sum_n s[b, n] * x[b, n, :]  (== S^T @ X per batch)
    pooled = jnp.sum(s[..., None] * x.astype(jnp.float32), axis=1)   # (Bt, E)
    o_ref[...] = pooled.astype(o_ref.dtype)


# ---------------------------------------------------------------------------
# Wrappers
# ---------------------------------------------------------------------------
@functools.partial(jax.jit, static_argnums=0)
def _pool_reduce(pooling_key, X):
    B, N, E = X.shape
    itemsize = X.dtype.itemsize
    budget = _block_budget_bytes()

    # Lane packing: fold g = 128/E rows into one 128-lane row when shapes allow.
    g = 0
    if E < 128 and 128 % E == 0:
        g_cand = 128 // E
        if N % g_cand == 0:
            g = g_cand

    if g > 1:
        Np = N // g
        Xp = X.reshape(B, Np, g * E)                 # contiguous: free reshape
        per_batch = 2 * _padded_block_bytes(Np, g * E, itemsize)  # double-buffered in
        Bt = _pick_block_batches(B, per_batch, budget)
        kernel = functools.partial(_reduce_packed_kernel, op=pooling_key,
                                   E=E, inv_n=1.0 / N)
        in_spec = pl.BlockSpec((Bt, Np, g * E), lambda i: (i, 0, 0))
        operand = Xp
    else:
        per_batch = 2 * _padded_block_bytes(N, E, itemsize)
        Bt = _pick_block_batches(B, per_batch, budget)
        kernel = functools.partial(_reduce_kernel, op=pooling_key, inv_n=1.0 / N)
        in_spec = pl.BlockSpec((Bt, N, E), lambda i: (i, 0, 0))
        operand = X

    return pl.pallas_call(
        kernel,
        out_shape=jax.ShapeDtypeStruct((B, E), X.dtype),
        grid_spec=pltpu.PrefetchScalarGridSpec(
            num_scalar_prefetch=0,
            grid=(pl.cdiv(B, Bt),),
            in_specs=[in_spec],
            out_specs=pl.BlockSpec((Bt, E), lambda i: (i, 0)),
        ),
        compiler_params=pltpu.CompilerParams(
            dimension_semantics=("parallel",),
            vmem_limit_bytes=_VMEM_LIMIT_BYTES,
        ),
    )(operand)


@jax.jit
def _pool_expert(X, w1_t, b1_row, w2_row, b2_vec):
    B, N, E = X.shape
    itemsize = X.dtype.itemsize
    # Per-batch VMEM: double-buffered input block + ~3 live f32 intermediates
    # (h, exp/softmax temporaries, broadcast s*x), all padded to (sublane,128) tiles.
    per_batch = 2 * _padded_block_bytes(N, E, itemsize) + 3 * _padded_block_bytes(N, E, 4)
    Bt = _pick_block_batches(B, per_batch, _block_budget_bytes())

    # Native-dtype MXU path: bf16 x bf16 -> f32 when X is bf16 (no-op for f32).
    w1 = w1_t.astype(X.dtype)

    out, S = pl.pallas_call(
        _expert_kernel,
        out_shape=(
            jax.ShapeDtypeStruct((B, E), X.dtype),
            jax.ShapeDtypeStruct((B, N), jnp.float32),   # lane-dense S, f32
        ),
        grid_spec=pltpu.PrefetchScalarGridSpec(
            num_scalar_prefetch=0,
            grid=(pl.cdiv(B, Bt),),
            in_specs=[
                pl.BlockSpec((Bt, N, E), lambda i: (i, 0, 0)),
                pl.BlockSpec((E, E), lambda i: (0, 0)),
                pl.BlockSpec((1, E), lambda i: (0, 0)),
                pl.BlockSpec((1, E), lambda i: (0, 0)),
                pl.BlockSpec(memory_space=pltpu.MemorySpace.SMEM),  # b2 scalar
            ],
            out_specs=[
                pl.BlockSpec((Bt, E), lambda i: (i, 0)),
                pl.BlockSpec((Bt, N), lambda i: (i, 0)),
            ],
        ),
        compiler_params=pltpu.CompilerParams(
            dimension_semantics=("parallel",),
            vmem_limit_bytes=_VMEM_LIMIT_BYTES,
        ),
    )(X, w1, b1_row, w2_row, b2_vec)
    # Wrapper-side reshape to the PyTorch S shape (B, N, 1): free layout plumbing.
    return out, S[..., None]


class PoolingPallas:
    """Mirror of the PyTorch Pooling module; forward() returns (pooled, S_or_None)."""

    def __init__(self, pooling_key, adj_size, embedding_size, key=None,
                 min_pallas_elements=0):
        self.pooling_key = pooling_key
        self.dimension = None
        # Problems smaller than this (in elements of X) use plain jnp: for tiny
        # shapes the fixed pallas_call overhead dwarfs the work. 0 = always Pallas.
        self.min_pallas_elements = min_pallas_elements
        if pooling_key in ("mean", "max"):
            self.dimension = embedding_size
        elif pooling_key == "expert":
            number_of_expert = 1
            self.dimension = embedding_size * number_of_expert
            E = embedding_size
            key = jax.random.PRNGKey(0) if key is None else key
            k1, k2, k3, k4 = jax.random.split(key, 4)
            bound = 1.0 / (E ** 0.5)  # same bound as torch.nn.Linear default init
            # PyTorch-layout weights: W1 (E, E), W2 (1, E)
            self.W1 = jax.random.uniform(k1, (E, E), jnp.float32, -bound, bound)
            self.b1 = jax.random.uniform(k2, (E,), jnp.float32, -bound, bound)
            self.W2 = jax.random.uniform(k3, (number_of_expert, E), jnp.float32, -bound, bound)
            self.b2 = jax.random.uniform(k4, (number_of_expert,), jnp.float32, -bound, bound)
            # Hoisted kernel-layout parameters (computed once, not per forward()).
            self.W1_T = jnp.asarray(self.W1).T                  # (E, E) in,out layout
            self.b1_row = jnp.asarray(self.b1).reshape(1, -1)   # (1, E) f32
            self.W2_row = jnp.asarray(self.W2)                  # (1, E) f32
            self.b2_vec = jnp.asarray(self.b2).reshape(1).astype(jnp.float32)  # (1,) SMEM
        else:
            raise NotImplementedError(
                f"Pooling operator {pooling_key} is not implemented yet!"
            )

    def get_dimension(self):
        return self.dimension

    def forward(self, X):
        small = X.size < self.min_pallas_elements
        if self.pooling_key in ("mean", "max"):
            if small:
                r = jnp.mean(X, axis=-2) if self.pooling_key == "mean" else jnp.max(X, axis=-2)
                return r, None
            return _pool_reduce(self.pooling_key, X), None
        if small:
            h = jnp.tanh(X @ self.W1.T + self.b1)
            S = jax.nn.softmax(h @ self.W2.T + self.b2, axis=1)
            pooled = jnp.einsum("bne,bnk->bke", X, S).reshape(X.shape[0], -1)
            return pooled.astype(X.dtype), S
        out, S = _pool_expert(X, self.W1_T, self.b1_row, self.W2_row, self.b2_vec)
        return out, S


# ---------------------------------------------------------------------------
# Reference (plain JAX) implementations for validation
# ---------------------------------------------------------------------------
def _ref_forward(mod, X):
    if mod.pooling_key == "mean":
        return jnp.mean(X, axis=-2), None
    if mod.pooling_key == "max":
        return jnp.max(X, axis=-2), None
    h = jnp.tanh(X @ mod.W1.T + mod.b1)
    logits = h @ mod.W2.T + mod.b2               # (B, N, 1)
    S = jax.nn.softmax(logits, axis=1)
    pooled = jnp.einsum("bne,bnk->bke", X, S).reshape(X.shape[0], -1)
    return pooled, S


if __name__ == "__main__":
    ok = True
    # Small shape matching the module defaults, plus a larger batch to exercise
    # multi-step grids and padded tail blocks.
    for (B, N, E) in [(2, 8, 32), (600, 8, 32)]:
        X = jax.random.normal(jax.random.PRNGKey(0), (B, N, E), jnp.float32)
        for key_name in ("mean", "max", "expert"):
            mod = PoolingPallas(key_name, adj_size=N, embedding_size=E)
            out, S = mod.forward(X)
            out = jax.block_until_ready(out)
            ref_out, ref_S = _ref_forward(mod, X)
            ok &= bool(jnp.allclose(out, ref_out, atol=1e-5, rtol=1e-5))
            if S is not None:
                S = jax.block_until_ready(S)
                ok &= bool(jnp.allclose(S, ref_S, atol=1e-5, rtol=1e-5))

    if ok:
        print("KERNEL_OK")
    else:
        print("KERNEL_MISMATCH")
</pallas_src>

<mosaic_0001>
module attributes {stable_mosaic.version = 11 : i64} {
  func.func @_reduce_packed_kernel(%arg0: i32, %arg1: memref<2x2x128xf32, #tpu.memory_space<vmem>>, %arg2: memref<2x32xf32, #tpu.memory_space<vmem>>) attributes {dimension_semantics = [#tpu.dimension_semantics<parallel>], iteration_bounds = array<i64: 1>, scalar_prefetch = 0 : i64, scratch_operands = 0 : i64, tpu.core_type = #tpu.core_type<tc>, window_params = [{transform_indices = @transform_0, window_bounds = array<i64: 2, 2, 128>}, {transform_indices = @transform_1, window_bounds = array<i64: 2, 32>}]} {
    %c0 = arith.constant 0 : index
    %c0_0 = arith.constant 0 : index
    %c0_1 = arith.constant 0 : index
    %0 = vector.load %arg1[%c0, %c0_0, %c0_1] : memref<2x2x128xf32, #tpu.memory_space<vmem>>, vector<2x2x128xf32>
    %cst = arith.constant dense<0.000000e+00> : vector<2x128xf32>
    %1 = vector.multi_reduction <add>, %0, %cst [1] : vector<2x2x128xf32> to vector<2x128xf32>
    %2 = vector.extract_strided_slice %1 {offsets = [0, 0], sizes = [2, 64], strides = [1, 1]} : vector<2x128xf32> to vector<2x64xf32>
    %3 = vector.extract_strided_slice %1 {offsets = [0, 64], sizes = [2, 64], strides = [1, 1]} : vector<2x128xf32> to vector<2x64xf32>
    %4 = arith.addf %2, %3 : vector<2x64xf32>
    %5 = vector.extract_strided_slice %4 {offsets = [0, 0], sizes = [2, 32], strides = [1, 1]} : vector<2x64xf32> to vector<2x32xf32>
    %6 = vector.extract_strided_slice %4 {offsets = [0, 32], sizes = [2, 32], strides = [1, 1]} : vector<2x64xf32> to vector<2x32xf32>
    %7 = arith.addf %5, %6 : vector<2x32xf32>
    %cst_2 = arith.constant 1.250000e-01 : f32
    %8 = vector.broadcast %cst_2 : f32 to vector<2x32xf32>
    %9 = arith.mulf %7, %8 : vector<2x32xf32>
    %c0_3 = arith.constant 0 : index
    %c0_4 = arith.constant 0 : index
    %10 = vector.load %arg2[%c0_3, %c0_4] : memref<2x32xf32, #tpu.memory_space<vmem>>, vector<2x32xf32>
    tpu.vector_store %arg2[%c0_3, %c0_4], %9 {strides = array<i32>} : memref<2x32xf32, #tpu.memory_space<vmem>>, vector<2x32xf32>,
    return
  }
  func.func @transform_0(%arg0: i32) -> (i32, i32, i32) {
    %c0_i32 = arith.constant 0 : i32
    %c0_i32_0 = arith.constant 0 : i32
    %c0_i32_1 = arith.constant 0 : i32
    return %arg0, %c0_i32, %c0_i32_0 : i32, i32, i32
  }
  func.func @transform_1(%arg0: i32) -> (i32, i32) {
    %c0_i32 = arith.constant 0 : i32
    %c0_i32_0 = arith.constant 0 : i32
    return %arg0, %c0_i32 : i32, i32
  }
}

</mosaic_0001>

<llo_original>
// kernel: _pool_reduce.1
$region0: #{_pool_reduce.1}
  #allocation0 [shape = 'u32[]', space=smem, size = 0x4, offset = 0x4, fixed_abs, tag = 'smem constant byte address 0x4 - core index']
  #allocation1 [shape = 'u32[72,128]{1,0:T(1,128)}', space=vmem, size = 0x9000, scoped, tag = 'internal scratch']
  %s0 = inlined_call_operand.vmem [shape: f32[2,2,128], index: 0, kind: input, shape index: {}]
  %s1 = inlined_call_operand.hbm [shape: f32[2,32], index: 1, kind: output, shape index: {}]
  %s2 = sld [smem:[#allocation0]]
  $region14: #{_pool_reduce.1} parent=0
    _
  %s4 = ssub.s32 1, %s2
  %s5 = scalar_select 0, %s4, %s2
  $region1: #{_pool_reduce.1} parent=0
    #allocation2 [shape = 'u8[1024]{0}', space=vmem, size = 0x400, scoped, tag = 'output window, operand 0, single buffered']
    #allocation3 [shape = 's32[1]{0}', space=sflag, size = 0x4, scoped, tag = 'scoped memory for _pool_reduce.1']
    %6 = vsyncpa [#allocation3], 0
    // Predicated region
    $region2: #{_pool_reduce.1} parent=1 // pred_check
      _
    $region3: #{_pool_reduce.1} parent=1 // pred_check_branch
      %8 = sbr.rel (0) target = $region5
    $region4: #{_pool_reduce.1} parent=1 // pred_region
      _
    $region5: #{_pool_reduce.1} parent=1 // pred_fallthru
      _
    %v9 = vld [vmem:[%s0] sm:$0x3]
    %v10 = vld [vmem:[%s0 + $0x2] sm:$0x3]
    %vm11 = vcmask 1041408
    %v12 = vsel %vm11, %v9, 0.0
    %v13 = vrot.slane %v12, 4
    %v14 = vadd.f32 %v12, %v13
    %v15 = vrot.slane %v14, 2
    %v16 = vadd.f32 %v14, %v15
    %v17 = vrot.slane %v16, 1
    %v18 = vadd.f32 %v16, %v17
    %v19 = vsel %vm11, %v10, 0.0
    %v20 = vrot.slane %v19, 4
    %v21 = vadd.f32 %v19, %v20
    %v22 = vrot.slane %v21, 2
    %v23 = vadd.f32 %v21, %v22
    %v24 = vrot.slane %v23, 1
    %v25 = vadd.f32 %v23, %v24
    %28 = vrot.lane.b32.xlu0 %v18, 64
    %v29 = vpop.permute.xlu0 %28
    %30 = vrot.lane.b32.xlu0 %v25, 64
    %v31 = vpop.permute.xlu0 %30
    %v34 = vadd.f32 %v18, %v29
    %v35 = vadd.f32 %v25, %v31
    %38 = vrot.lane.b32.xlu0 %v34, 96
    %v39 = vpop.permute.xlu0 %38
    %40 = vrot.lane.b32.xlu0 %v35, 96
    %v41 = vpop.permute.xlu0 %40
    %v44 = vadd.f32 %v34, %v39
    %v45 = vadd.f32 %v35, %v41
    %v46 = vmul.f32 %v44, 0.125
    %v47 = vmul.f32 %v45, 0.125
    %v50 = vrot.slane %v47, 7
    %vm51 = vcmask 1041409
    %v52 = vsel %vm51, %v50, %v46
    %vm54 = vcmask 254976
    %55 = vst.msk [vmem:[#allocation2] sm:$0x3] %vm54, %v52
    // Predicated region
    $region6: #{_pool_reduce.1} parent=1 // pred_check
      _
    $region7: #{_pool_reduce.1} parent=1 // pred_check_branch
      %57 = sbr.rel (0) target = $region9
    $region8: #{_pool_reduce.1} parent=1 // pred_region
      %59 = vsyncadd [#allocation3], 0
      %s61 = sshll.u32 [#allocation2], 4
      %s62 = int_to_ptr.vmem [resolvable:$true] %s61
      %s63 = sshll.u32 %s1, 4
      %s64 = int_to_ptr.hbm [resolvable:$true] %s63
      %66 = dma.vmem_to_hbm [thread:$0]  %s62, 32, %s64, [#allocation3]
    $region9: #{_pool_reduce.1} parent=1 // pred_fallthru
      _
    // Predicated region
    $region10: #{_pool_reduce.1} parent=1 // pred_check
      _
    $region11: #{_pool_reduce.1} parent=1 // pred_check_branch
      %68 = sbr.rel (0) target = $region13
    $region12: #{_pool_reduce.1} parent=1 // pred_region
      %70 = dma.done [#allocation3], 32
    $region13: #{_pool_reduce.1} parent=1 // pred_fallthru
      _
    %71 = vsyncpa [#allocation3], 1

</llo_original>
